<compile_context>
chip_gen: v7x
topology: tpu7x:2x2x1
jax: 0.10.0
libtpu: 0.0.40
codegen_flags: <defaults>
</compile_context>

<pallas_src>
import jax
import jax.numpy as jnp
from jax import lax
from jax.experimental import pallas as pl
from jax.experimental.pallas import tpu as pltpu

EPS = 1e-6
_BLOCK_BYTES_CAP = 3 * 1024 * 1024   # per-input, per-block VMEM budget
_MAX_TILE_HW = 2048                  # lanes per block (>=512 reaches ~85% of HBM roofline)


def _cosine_kernel(x1_ref, x2_ref, o_ref):
    # x1_ref / x2_ref: (tile_b, C, tile_hw) VMEM tiles.
    # o_ref:           (tile_b, tile_hw) output tile (lane/sublane dense).
    x1 = x1_ref[...].astype(jnp.float32)
    x2 = x2_ref[...].astype(jnp.float32)

    dot = jnp.sum(x1 * x2, axis=1)    # (tile_b, tile_hw)
    n1sq = jnp.sum(x1 * x1, axis=1)   # (tile_b, tile_hw)
    n2sq = jnp.sum(x2 * x2, axis=1)   # (tile_b, tile_hw)

    # PyTorch formula: dot / max(||x1|| * ||x2||, eps)
    #   == dot * rsqrt(max(n1sq * n2sq, eps^2))          (single EUP op)
    denom_sq = jnp.maximum(n1sq * n2sq, EPS * EPS)
    o_ref[...] = (dot * lax.rsqrt(denom_sq)).astype(o_ref.dtype)


def _pick_tile(total, base, cap):
    """Largest multiple of `base` that divides `total` and is <= cap.

    Falls back to the full extent `total` when it already fits under `cap`
    or when `total` is not a multiple of `base` (full-extent blocks are
    always layout-legal)."""
    cap = max(cap, base)
    if total <= cap or total % base != 0:
        return total
    best = base
    for t in range(base, cap + 1, base):
        if total % t == 0:
            best = t
    return best


def cosine_similarity_dim1(x1, x2):
    """Cosine similarity along dim=1 (channels) of NCHW tensors."""
    assert x1.shape == x2.shape, "x1/x2 must have identical shapes"
    B, C, H, W = x1.shape
    HW = H * W
    out_dtype = jnp.result_type(x1.dtype, x2.dtype)
    itemsize = max(jnp.dtype(x1.dtype).itemsize, jnp.dtype(x2.dtype).itemsize)

    x1r = x1.reshape(B, C, HW)
    x2r = x2.reshape(B, C, HW)

    # ---- tile selection (VMEM-budget aware; works on v5e/v6e/v7x defaults) ----
    # Lane axis first: multiple of 128, capped so even an 8-row batch block
    # stays under the per-block byte budget.
    hw_elem_cap = max(128, _BLOCK_BYTES_CAP // (C * itemsize * 8))
    tile_hw = _pick_tile(HW, 128, min(_MAX_TILE_HW, hw_elem_cap))
    # Batch axis: multiple of 8 (fills all sublanes), capped by remaining budget.
    b_cap = max(8, _BLOCK_BYTES_CAP // (C * tile_hw * itemsize))
    tile_b = _pick_tile(B, 8, b_cap)

    grid = (B // tile_b, HW // tile_hw)

    out = pl.pallas_call(
        _cosine_kernel,
        out_shape=jax.ShapeDtypeStruct((B, HW), out_dtype),
        grid_spec=pl.GridSpec(
            grid=grid,
            in_specs=[
                pl.BlockSpec((tile_b, C, tile_hw), lambda b, h: (b, 0, h)),
                pl.BlockSpec((tile_b, C, tile_hw), lambda b, h: (b, 0, h)),
            ],
            out_specs=pl.BlockSpec((tile_b, tile_hw), lambda b, h: (b, h)),
        ),
        compiler_params=pltpu.CompilerParams(
            dimension_semantics=("parallel", "parallel")),
    )(x1r, x2r)

    return out.reshape(B, H, W)


if __name__ == "__main__":
    key = jax.random.PRNGKey(0)
    k1, k2 = jax.random.split(key)
    # Small shapes consistent with the module: NCHW, reduce over channels.
    x1 = jax.random.normal(k1, (2, 4, 16, 16), dtype=jnp.float32)
    x2 = jax.random.normal(k2, (2, 4, 16, 16), dtype=jnp.float32)

    out = cosine_similarity_dim1(x1, x2)
    jax.block_until_ready(out)

    # Pure-JAX reference (PyTorch formula).
    dot = jnp.sum(x1 * x2, axis=1)
    n1 = jnp.linalg.norm(x1, axis=1)
    n2 = jnp.linalg.norm(x2, axis=1)
    ref = dot / jnp.maximum(n1 * n2, EPS)

    assert out.shape == (2, 16, 16)
    assert jnp.max(jnp.abs(out - ref)) < 1e-5

    print("KERNEL_OK")
</pallas_src>

<mosaic_0001>
module attributes {stable_mosaic.version = 11 : i64} {
  func.func @_cosine_kernel(%arg0: i32, %arg1: i32, %arg2: memref<2x4x256xf32, #tpu.memory_space<vmem>>, %arg3: memref<2x4x256xf32, #tpu.memory_space<vmem>>, %arg4: memref<2x256xf32, #tpu.memory_space<vmem>>) attributes {dimension_semantics = [#tpu.dimension_semantics<parallel>, #tpu.dimension_semantics<parallel>], iteration_bounds = array<i64: 1, 1>, scalar_prefetch = 0 : i64, scratch_operands = 0 : i64, tpu.core_type = #tpu.core_type<tc>, window_params = [{transform_indices = @transform_0, window_bounds = array<i64: 2, 4, 256>}, {transform_indices = @transform_1, window_bounds = array<i64: 2, 4, 256>}, {transform_indices = @transform_2, window_bounds = array<i64: 2, 256>}]} {
    %c0 = arith.constant 0 : index
    %c0_0 = arith.constant 0 : index
    %c0_1 = arith.constant 0 : index
    %0 = vector.load %arg2[%c0, %c0_0, %c0_1] : memref<2x4x256xf32, #tpu.memory_space<vmem>>, vector<2x4x256xf32>
    %c0_2 = arith.constant 0 : index
    %c0_3 = arith.constant 0 : index
    %c0_4 = arith.constant 0 : index
    %1 = vector.load %arg3[%c0_2, %c0_3, %c0_4] : memref<2x4x256xf32, #tpu.memory_space<vmem>>, vector<2x4x256xf32>
    %2 = arith.mulf %0, %1 : vector<2x4x256xf32>
    %cst = arith.constant dense<0.000000e+00> : vector<2x256xf32>
    %3 = vector.multi_reduction <add>, %2, %cst [1] : vector<2x4x256xf32> to vector<2x256xf32>
    %4 = arith.mulf %0, %0 : vector<2x4x256xf32>
    %cst_5 = arith.constant dense<0.000000e+00> : vector<2x256xf32>
    %5 = vector.multi_reduction <add>, %4, %cst_5 [1] : vector<2x4x256xf32> to vector<2x256xf32>
    %6 = arith.mulf %1, %1 : vector<2x4x256xf32>
    %cst_6 = arith.constant dense<0.000000e+00> : vector<2x256xf32>
    %7 = vector.multi_reduction <add>, %6, %cst_6 [1] : vector<2x4x256xf32> to vector<2x256xf32>
    %8 = arith.mulf %5, %7 : vector<2x256xf32>
    %cst_7 = arith.constant 9.99999996E-13 : f32
    %9 = vector.broadcast %cst_7 : f32 to vector<2x256xf32>
    %10 = arith.maximumf %8, %9 : vector<2x256xf32>
    %11 = math.rsqrt %10 : vector<2x256xf32>
    %12 = arith.mulf %3, %11 : vector<2x256xf32>
    %c0_8 = arith.constant 0 : index
    %c0_9 = arith.constant 0 : index
    %13 = vector.load %arg4[%c0_8, %c0_9] : memref<2x256xf32, #tpu.memory_space<vmem>>, vector<2x256xf32>
    tpu.vector_store %arg4[%c0_8, %c0_9], %12 {strides = array<i32>} : memref<2x256xf32, #tpu.memory_space<vmem>>, vector<2x256xf32>,
    return
  }
  func.func @transform_0(%arg0: i32, %arg1: i32) -> (i32, i32, i32) {
    %c0_i32 = arith.constant 0 : i32
    %c0_i32_0 = arith.constant 0 : i32
    return %arg0, %c0_i32, %arg1 : i32, i32, i32
  }
  func.func @transform_1(%arg0: i32, %arg1: i32) -> (i32, i32, i32) {
    %c0_i32 = arith.constant 0 : i32
    %c0_i32_0 = arith.constant 0 : i32
    return %arg0, %c0_i32, %arg1 : i32, i32, i32
  }
  func.func @transform_2(%arg0: i32, %arg1: i32) -> (i32, i32) {
    %c0_i32 = arith.constant 0 : i32
    return %arg0, %arg1 : i32, i32
  }
}

</mosaic_0001>

<llo_original>
// kernel: tpu_custom_call.1
$region0: #{tpu_custom_call.1}
  #allocation0 [shape = 'u32[]', space=smem, size = 0x4, offset = 0x4, fixed_abs, tag = 'smem constant byte address 0x4 - core index']
  #allocation1 [shape = 'u32[144,128]{1,0:T(1,128)}', space=vmem, size = 0x12000, scoped, tag = 'internal scratch']
  %s0 = inlined_call_operand.hbm [shape: f32[2,4,256], index: 0, kind: input, shape index: {}]
  %s1 = inlined_call_operand.hbm [shape: f32[2,4,256], index: 1, kind: input, shape index: {}]
  %s2 = inlined_call_operand.hbm [shape: f32[2,256], index: 2, kind: output, shape index: {}]
  %s3 = sld [smem:[#allocation0]]
  $region26: #{tpu_custom_call.1} parent=0
    _
  %s5 = ssub.s32 1, %s3
  %s6 = scalar_select 0, %s5, %s3
  $region1: #{tpu_custom_call.1} parent=0
    #allocation2 [shape = 'u8[8192]{0}', space=vmem, size = 0x2000, scoped, tag = 'input window, operand 0, single buffered']
    #allocation3 [shape = 's32[1]{0}', space=sflag, size = 0x4, scoped, tag = 'scoped memory for tpu_custom_call.1']
    #allocation4 [shape = 's32[1]{0}', space=sflag, size = 0x4, scoped, tag = 'scoped memory for tpu_custom_call.1']
    #allocation5 [shape = 'u8[8192]{0}', space=vmem, size = 0x2000, scoped, tag = 'input window, operand 1, single buffered']
    #allocation6 [shape = 's32[1]{0}', space=sflag, size = 0x4, scoped, tag = 'scoped memory for tpu_custom_call.1']
    #allocation7 [shape = 'u8[2048]{0}', space=vmem, size = 0x800, scoped, tag = 'output window, operand 0, single buffered']
    %7 = vsyncpa [#allocation3], 0
    %8 = vsyncpa [#allocation6], 0
    %9 = vsyncpa [#allocation4], 0
    // Predicated region
    $region2: #{tpu_custom_call.1} parent=1 // pred_check
      _
    $region3: #{tpu_custom_call.1} parent=1 // pred_check_branch
      %11 = sbr.rel (0) target = $region5
    $region4: #{tpu_custom_call.1} parent=1 // pred_region
      %s13 = ssub.s32 256, 256
      %14 = vsyncadd [#allocation3], %s13
      %s15 = sshll.u32 [#allocation2], 4
      %s16 = int_to_ptr.vmem [resolvable:$true] %s15
      %21 = dma.hbm_to_vmem [thread:$0]  %s0, 256, %s16, [#allocation3], 128, 128, 8
    $region5: #{tpu_custom_call.1} parent=1 // pred_fallthru
      _
    // Predicated region
    $region6: #{tpu_custom_call.1} parent=1 // pred_check
      _
    $region7: #{tpu_custom_call.1} parent=1 // pred_check_branch
      %23 = sbr.rel (0) target = $region9
    $region8: #{tpu_custom_call.1} parent=1 // pred_region
      %s25 = ssub.s32 256, 256
      %26 = vsyncadd [#allocation6], %s25
      %s27 = sshll.u32 [#allocation5], 4
      %s28 = int_to_ptr.vmem [resolvable:$true] %s27
      %33 = dma.hbm_to_vmem [thread:$0]  %s1, 256, %s28, [#allocation6], 128, 128, 8
    $region9: #{tpu_custom_call.1} parent=1 // pred_fallthru
      _
    // Predicated region
    $region10: #{tpu_custom_call.1} parent=1 // pred_check
      _
    $region11: #{tpu_custom_call.1} parent=1 // pred_check_branch
      %35 = sbr.rel (0) target = $region13
    $region12: #{tpu_custom_call.1} parent=1 // pred_region
      %36 = dma.done [#allocation3], 256
    $region13: #{tpu_custom_call.1} parent=1 // pred_fallthru
      _
    // Predicated region
    $region14: #{tpu_custom_call.1} parent=1 // pred_check
      _
    $region15: #{tpu_custom_call.1} parent=1 // pred_check_branch
      %38 = sbr.rel (0) target = $region17
    $region16: #{tpu_custom_call.1} parent=1 // pred_region
      %39 = dma.done [#allocation6], 256
    $region17: #{tpu_custom_call.1} parent=1 // pred_fallthru
      _
    %v40 = vld [vmem:[#allocation2] sm:$0xff]
    %v41 = vld [vmem:[#allocation2 + $0x8] sm:$0xff]
    %v42 = vld [vmem:[#allocation5] sm:$0xff]
    %v43 = vld [vmem:[#allocation5 + $0x8] sm:$0xff]
    %v44 = vmul.f32 %v40, %v42
    %v45 = vmul.f32 %v41, %v43
    %v48 = vcombine.high %v44, %v44
    %v49 = vcombine.high %v45, %v45
    %vm52 = vcmask 1043456
    %v53 = vsel %vm52, %v44, 0.0
    %v54 = vrot.slane %v53, 4
    %v55 = vadd.f32 %v53, %v54
    %v56 = vrot.slane %v55, 2
    %v57 = vadd.f32 %v55, %v56
    %v58 = vrot.slane %v57, 1
    %v59 = vadd.f32 %v57, %v58
    %v60 = vsel %vm52, %v48, 0.0
    %v61 = vrot.slane %v60, 4
    %v62 = vadd.f32 %v60, %v61
    %v63 = vrot.slane %v62, 2
    %v64 = vadd.f32 %v62, %v63
    %v65 = vrot.slane %v64, 1
    %v66 = vadd.f32 %v64, %v65
    %v67 = vsel %vm52, %v45, 0.0
    %v68 = vrot.slane %v67, 4
    %v69 = vadd.f32 %v67, %v68
    %v70 = vrot.slane %v69, 2
    %v71 = vadd.f32 %v69, %v70
    %v72 = vrot.slane %v71, 1
    %v73 = vadd.f32 %v71, %v72
    %v74 = vsel %vm52, %v49, 0.0
    %v75 = vrot.slane %v74, 4
    %v76 = vadd.f32 %v74, %v75
    %v77 = vrot.slane %v76, 2
    %v78 = vadd.f32 %v76, %v77
    %v79 = vrot.slane %v78, 1
    %v80 = vadd.f32 %v78, %v79
    %v81 = vmul.f32 %v40, %v40
    %v82 = vmul.f32 %v41, %v41
    %v85 = vcombine.high %v81, %v81
    %v86 = vcombine.high %v82, %v82
    %v89 = vsel %vm52, %v81, 0.0
    %v90 = vrot.slane %v89, 4
    %v91 = vadd.f32 %v89, %v90
    %v92 = vrot.slane %v91, 2
    %v93 = vadd.f32 %v91, %v92
    %v94 = vrot.slane %v93, 1
    %v95 = vadd.f32 %v93, %v94
    %v96 = vsel %vm52, %v85, 0.0
    %v97 = vrot.slane %v96, 4
    %v98 = vadd.f32 %v96, %v97
    %v99 = vrot.slane %v98, 2
    %v100 = vadd.f32 %v98, %v99
    %v101 = vrot.slane %v100, 1
    %v102 = vadd.f32 %v100, %v101
    %v103 = vsel %vm52, %v82, 0.0
    %v104 = vrot.slane %v103, 4
    %v105 = vadd.f32 %v103, %v104
    %v106 = vrot.slane %v105, 2
    %v107 = vadd.f32 %v105, %v106
    %v108 = vrot.slane %v107, 1
    %v109 = vadd.f32 %v107, %v108
    %v110 = vsel %vm52, %v86, 0.0
    %v111 = vrot.slane %v110, 4
    %v112 = vadd.f32 %v110, %v111
    %v113 = vrot.slane %v112, 2
    %v114 = vadd.f32 %v112, %v113
    %v115 = vrot.slane %v114, 1
    %v116 = vadd.f32 %v114, %v115
    %v117 = vmul.f32 %v42, %v42
    %v118 = vmul.f32 %v43, %v43
    %v121 = vcombine.high %v117, %v117
    %v122 = vcombine.high %v118, %v118
    %v125 = vsel %vm52, %v117, 0.0
    %v126 = vrot.slane %v125, 4
    %v127 = vadd.f32 %v125, %v126
    %v128 = vrot.slane %v127, 2
    %v129 = vadd.f32 %v127, %v128
    %v130 = vrot.slane %v129, 1
    %v131 = vadd.f32 %v129, %v130
    %v132 = vsel %vm52, %v121, 0.0
    %v133 = vrot.slane %v132, 4
    %v134 = vadd.f32 %v132, %v133
    %v135 = vrot.slane %v134, 2
    %v136 = vadd.f32 %v134, %v135
    %v137 = vrot.slane %v136, 1
    %v138 = vadd.f32 %v136, %v137
    %v139 = vsel %vm52, %v118, 0.0
    %v140 = vrot.slane %v139, 4
    %v141 = vadd.f32 %v139, %v140
    %v142 = vrot.slane %v141, 2
    %v143 = vadd.f32 %v141, %v142
    %v144 = vrot.slane %v143, 1
    %v145 = vadd.f32 %v143, %v144
    %v146 = vsel %vm52, %v122, 0.0
    %v147 = vrot.slane %v146, 4
    %v148 = vadd.f32 %v146, %v147
    %v149 = vrot.slane %v148, 2
    %v150 = vadd.f32 %v148, %v149
    %v151 = vrot.slane %v150, 1
    %v152 = vadd.f32 %v150, %v151
    %v153 = vmul.f32 %v95, %v131
    %v154 = vmul.f32 %v102, %v138
    %v155 = vmul.f32 %v109, %v145
    %v156 = vmul.f32 %v116, %v152
    %v157 = vmax.f32 %v153, 1e-12
    %v158 = vmax.f32 %v154, 1e-12
    %v159 = vmax.f32 %v155, 1e-12
    %v160 = vmax.f32 %v156, 1e-12
    %v161 = vrsqrt.pop %v157
    %v162 = vrsqrt.pop %v158
    %v163 = vrsqrt.pop %v159
    %v164 = vrsqrt.pop %v160
    %v165 = vmul.f32 %v59, %v161
    %v166 = vmul.f32 %v66, %v162
    %v167 = vmul.f32 %v73, %v163
    %v168 = vmul.f32 %v80, %v164
    %v173 = vcombine.low %v165, %v166
    %v175 = vunpack.c.l.s4 1983009808
    %v176 = vunpack.c.0.s8 %v175
    %v177 = vlaneseq
    %v178 = vshrl.u32 %v177, 7
    %v179 = vsub.s32 %v176, %v178
    %v180 = vrot.slane %v173, %v179
    %v181 = vcombine.low %v167, %v168
    %v183 = vunpack.c.l.s4 1983009808
    %v184 = vunpack.c.0.s8 %v183
    %v185 = vlaneseq
    %v186 = vshrl.u32 %v185, 7
    %v187 = vsub.s32 %v184, %v186
    %v188 = vrot.slane %v181, %v187
    %vm189 = vcmask 1044484
    %v190 = vsel %vm189, %v180, %v180
    %vm191 = vcmask 1046534
    %v192 = vsel %vm191, %v180, %v190
    %v193 = vrot.slane %v188, 7
    %vm194 = vcmask 1041409
    %v195 = vsel %vm194, %v193, %v192
    %vm196 = vcmask 1043459
    %v197 = vsel %vm196, %v193, %v195
    %vm198 = vcmask 1045509
    %v199 = vsel %vm198, %v193, %v197
    %vm200 = vcmask 1047559
    %v201 = vsel %vm200, %v193, %v199
    %203 = vst [vmem:[#allocation7] sm:$0xf] %v201
    // Predicated region
    $region18: #{tpu_custom_call.1} parent=1 // pred_check
      _
    $region19: #{tpu_custom_call.1} parent=1 // pred_check_branch
      %205 = sbr.rel (0) target = $region21
    $region20: #{tpu_custom_call.1} parent=1 // pred_region
      %s207 = ssub.s32 64, 64
      %208 = vsyncadd [#allocation4], %s207
      %s210 = sshll.u32 [#allocation7], 4
      %s211 = int_to_ptr.vmem [resolvable:$true] %s210
      %213 = dma.vmem_to_hbm [thread:$0]  %s211, 64, %s2, [#allocation4]
    $region21: #{tpu_custom_call.1} parent=1 // pred_fallthru
      _
    // Predicated region
    $region22: #{tpu_custom_call.1} parent=1 // pred_check
      _
    $region23: #{tpu_custom_call.1} parent=1 // pred_check_branch
      %215 = sbr.rel (0) target = $region25
    $region24: #{tpu_custom_call.1} parent=1 // pred_region
      %216 = dma.done [#allocation4], 64
    $region25: #{tpu_custom_call.1} parent=1 // pred_fallthru
      _
    %217 = vsyncpa [#allocation3], 1
    %218 = vsyncpa [#allocation6], 1
    %219 = vsyncpa [#allocation4], 1

</llo_original>
